<compile_context>
chip_gen: v7x
topology: tpu7x:2x2x1
jax: 0.10.0
libtpu: 0.0.40
codegen_flags: <defaults>
</compile_context>

<pallas_src>
import functools

import jax
import jax.numpy as jnp
from jax.experimental import pallas as pl
from jax.experimental.pallas import tpu as pltpu

IN_FEATURES = 260
HIDDEN = 83
HIDDEN_PAD = 128  # one full lane tile


def playing_net_kernel(x_ref, w1_ref, b1_ref, w2_ref, b2_ref, o_ref):
    # x_ref:  (TB, 260)            w1_ref: (260, 128)   b1_ref: (1, 128)
    # w2_ref: (1, 128) (row layout of the (83,1) column, zero padded)
    # b2_ref: (1, 1) in SMEM       o_ref:  (TB, 1)
    x = x_ref[...]
    h = jnp.dot(x, w1_ref[...], preferred_element_type=jnp.float32)      # MXU, (TB, 128)
    h = jax.nn.sigmoid(h + b1_ref[...])                                   # VPU + EUP
    # Layer 2 as per-row dot on VPU + XLU lane reduction.
    y = jnp.sum(h * w2_ref[...], axis=-1, keepdims=True) + b2_ref[0, 0]   # (TB, 1)
    o_ref[...] = jax.nn.sigmoid(y).astype(o_ref.dtype)


def _round_up(n, m):
    return ((n + m - 1) // m) * m


@functools.partial(jax.jit, static_argnames=("block_b",))
def playing_network_forward(x, w1, b1, w2, b2, *, block_b=512):
    """Forward pass equal to sigmoid(sigmoid(x @ w1 + b1) @ w2 + b2).

    x:  (B, 260) f32
    w1: (260, 83)   b1: (1, 83) or (83,)      (layer 1 in (in, out) layout,
    w2: (83, 1)     b2: scalar / (1,) / (1,1)  i.e. PyTorch's W.T)
    returns (B, 1) f32.
    """
    B = x.shape[0]
    x = x.astype(jnp.float32)

    # Zero-pad hidden dim 83 -> 128. Padded w2 rows are zero, so padded lanes are inert.
    w1p = jnp.zeros((IN_FEATURES, HIDDEN_PAD), jnp.float32).at[:, :HIDDEN].set(
        w1.astype(jnp.float32))
    b1p = jnp.zeros((1, HIDDEN_PAD), jnp.float32).at[:, :HIDDEN].set(
        b1.astype(jnp.float32).reshape(1, HIDDEN))
    w2p = jnp.zeros((1, HIDDEN_PAD), jnp.float32).at[:, :HIDDEN].set(
        w2.astype(jnp.float32).reshape(1, HIDDEN))
    b2p = jnp.asarray(b2, jnp.float32).reshape(1, 1)

    # Batch tiling: up to 512-row tiles for throughput at large B; shrink for tiny batches.
    tb = min(block_b, _round_up(B, 8))
    num_tiles = pl.cdiv(B, tb)
    b_pad = num_tiles * tb
    x_pad = x if b_pad == B else jnp.pad(x, ((0, b_pad - B), (0, 0)))

    cost = pl.CostEstimate(
        flops=2 * b_pad * IN_FEATURES * HIDDEN_PAD + 3 * b_pad * HIDDEN_PAD,
        transcendentals=b_pad * (HIDDEN_PAD + 1),
        bytes_accessed=4 * (b_pad * IN_FEATURES + b_pad
                            + IN_FEATURES * HIDDEN_PAD + 3 * HIDDEN_PAD + 1),
    )

    out = pl.pallas_call(
        playing_net_kernel,
        out_shape=jax.ShapeDtypeStruct((b_pad, 1), jnp.float32),
        grid=(num_tiles,),
        in_specs=[
            pl.BlockSpec((tb, IN_FEATURES), lambda i: (i, 0)),           # x: streamed
            pl.BlockSpec((IN_FEATURES, HIDDEN_PAD), lambda i: (0, 0)),   # w1: resident
            pl.BlockSpec((1, HIDDEN_PAD), lambda i: (0, 0)),             # b1: resident
            pl.BlockSpec((1, HIDDEN_PAD), lambda i: (0, 0)),             # w2 row: resident
            pl.BlockSpec(memory_space=pltpu.MemorySpace.SMEM),           # b2: scalar
        ],
        out_specs=pl.BlockSpec((tb, 1), lambda i: (i, 0)),
        compiler_params=pltpu.CompilerParams(
            dimension_semantics=("parallel",),     # shard batch tiles across TCs (v7x)
            vmem_limit_bytes=32 * 1024 * 1024,     # ample; usage ~2*TB*260*4 ≈ 1 MiB
        ),
        cost_estimate=cost,
    )(x_pad, w1p, b1p, w2p, b2p)

    return out[:B]


def init_params(key):
    """Deterministic init mimicking nn.Linear default (U[-1/sqrt(fan_in), 1/sqrt(fan_in)])."""
    k1, k2, k3, k4 = jax.random.split(key, 4)
    bound1 = 1.0 / jnp.sqrt(260.0)
    bound2 = 1.0 / jnp.sqrt(83.0)
    w1 = jax.random.uniform(k1, (260, 83), jnp.float32, -bound1, bound1)
    b1 = jax.random.uniform(k2, (1, 83), jnp.float32, -bound1, bound1)
    w2 = jax.random.uniform(k3, (83, 1), jnp.float32, -bound2, bound2)
    b2 = jax.random.uniform(k4, (1, 1), jnp.float32, -bound2, bound2)
    return w1, b1, w2, b2


if __name__ == "__main__":
    key = jax.random.PRNGKey(0)
    k_x, k_x2, k_p = jax.random.split(key, 3)

    w1, b1, w2, b2 = init_params(k_p)

    def ref_fwd(x):
        return jax.nn.sigmoid(jax.nn.sigmoid(x @ w1 + b1) @ w2 + b2)

    # Small batch (matches typical module usage: a single game state or small batch).
    x_small = jax.random.normal(k_x, (8, 260), jnp.float32)
    out_small = jax.block_until_ready(playing_network_forward(x_small, w1, b1, w2, b2))
    assert out_small.shape == (8, 1)
    assert jnp.allclose(out_small, ref_fwd(x_small), atol=1e-5, rtol=1e-5)

    # Non-multiple-of-tile batch to exercise the batch grid + padding path.
    x_big = jax.random.normal(k_x2, (600, 260), jnp.float32)
    out_big = jax.block_until_ready(playing_network_forward(x_big, w1, b1, w2, b2))
    assert out_big.shape == (600, 1)
    assert jnp.allclose(out_big, ref_fwd(x_big), atol=1e-5, rtol=1e-5)

    print("KERNEL_OK")
</pallas_src>

<mosaic_0001>
module attributes {stable_mosaic.version = 11 : i64} {
  func.func @playing_net_kernel(%arg0: i32, %arg1: memref<8x260xf32, #tpu.memory_space<vmem>>, %arg2: memref<260x128xf32, #tpu.memory_space<vmem>>, %arg3: memref<1x128xf32, #tpu.memory_space<vmem>>, %arg4: memref<1x128xf32, #tpu.memory_space<vmem>>, %arg5: memref<1x1xf32, #tpu.memory_space<smem>>, %arg6: memref<8x1xf32, #tpu.memory_space<vmem>>) attributes {dimension_semantics = [#tpu.dimension_semantics<parallel>], iteration_bounds = array<i64: 1>, scalar_prefetch = 0 : i64, scratch_operands = 0 : i64, tpu.core_type = #tpu.core_type<tc>, window_params = [{transform_indices = @transform_0, window_bounds = array<i64: 8, 260>}, {pipeline_mode = #tpu.pipeline_mode<synchronous>, transform_indices = @transform_1, window_bounds = array<i64: 260, 128>}, {pipeline_mode = #tpu.pipeline_mode<synchronous>, transform_indices = @transform_2, window_bounds = array<i64: 1, 128>}, {pipeline_mode = #tpu.pipeline_mode<synchronous>, transform_indices = @transform_3, window_bounds = array<i64: 1, 128>}, {transform_indices = @transform_4, window_bounds = array<i64: 1, 1>}, {transform_indices = @transform_5, window_bounds = array<i64: 8, 1>}]} {
    %c0 = arith.constant 0 : index
    %c0_0 = arith.constant 0 : index
    %0 = vector.load %arg1[%c0, %c0_0] : memref<8x260xf32, #tpu.memory_space<vmem>>, vector<8x260xf32>
    %c0_1 = arith.constant 0 : index
    %c0_2 = arith.constant 0 : index
    %1 = vector.load %arg2[%c0_1, %c0_2] : memref<260x128xf32, #tpu.memory_space<vmem>>, vector<260x128xf32>
    %cst = arith.constant dense<0.000000e+00> : vector<8x128xf32>
    %2 = tpu.matmul %0, %1, %cst {dimension_numbers = #tpu.dot_dimension_numbers<[1], [0], [0], [1], [0, 0, 1, 1], [], []>} : vector<8x260xf32>, vector<260x128xf32>, vector<8x128xf32> -> vector<8x128xf32>
    %c0_3 = arith.constant 0 : index
    %c0_4 = arith.constant 0 : index
    %3 = vector.load %arg3[%c0_3, %c0_4] : memref<1x128xf32, #tpu.memory_space<vmem>>, vector<1x128xf32>
    %4 = vector.broadcast %3 : vector<1x128xf32> to vector<8x128xf32>
    %5 = arith.addf %2, %4 : vector<8x128xf32>
    %6 = arith.negf %5 : vector<8x128xf32>
    %7 = math.exp %6 : vector<8x128xf32>
    %cst_5 = arith.constant 1.000000e+00 : f32
    %8 = vector.broadcast %cst_5 : f32 to vector<8x128xf32>
    %9 = arith.addf %8, %7 : vector<8x128xf32>
    %10 = arith.divf %8, %9 : vector<8x128xf32>
    %c0_6 = arith.constant 0 : index
    %c0_7 = arith.constant 0 : index
    %11 = vector.load %arg4[%c0_6, %c0_7] : memref<1x128xf32, #tpu.memory_space<vmem>>, vector<1x128xf32>
    %12 = vector.broadcast %11 : vector<1x128xf32> to vector<8x128xf32>
    %13 = arith.mulf %10, %12 : vector<8x128xf32>
    %cst_8 = arith.constant dense<0.000000e+00> : vector<8xf32>
    %14 = vector.multi_reduction <add>, %13, %cst_8 [1] : vector<8x128xf32> to vector<8xf32>
    %15 = vector.shape_cast %14 : vector<8xf32> to vector<8x1xf32>
    %c0_9 = arith.constant 0 : index
    %c0_10 = arith.constant 0 : index
    %16 = memref.load %arg5[%c0_9, %c0_10] : memref<1x1xf32, #tpu.memory_space<smem>>
    %17 = vector.broadcast %16 : f32 to vector<8x1xf32>
    %18 = arith.addf %15, %17 : vector<8x1xf32>
    %19 = arith.negf %18 : vector<8x1xf32>
    %20 = math.exp %19 : vector<8x1xf32>
    %cst_11 = arith.constant 1.000000e+00 : f32
    %21 = vector.broadcast %cst_11 : f32 to vector<8x1xf32>
    %22 = arith.addf %21, %20 : vector<8x1xf32>
    %23 = arith.divf %21, %22 : vector<8x1xf32>
    %c0_12 = arith.constant 0 : index
    %c0_13 = arith.constant 0 : index
    %24 = vector.load %arg6[%c0_12, %c0_13] : memref<8x1xf32, #tpu.memory_space<vmem>>, vector<8x1xf32>
    tpu.vector_store %arg6[%c0_12, %c0_13], %23 {strides = array<i32>} : memref<8x1xf32, #tpu.memory_space<vmem>>, vector<8x1xf32>,
    return
  }
  func.func @transform_0(%arg0: i32) -> (i32, i32) {
    %c0_i32 = arith.constant 0 : i32
    %c0_i32_0 = arith.constant 0 : i32
    return %arg0, %c0_i32 : i32, i32
  }
  func.func @transform_1(%arg0: i32) -> (i32, i32) {
    %c0_i32 = arith.constant 0 : i32
    %c0_i32_0 = arith.constant 0 : i32
    %c0_i32_1 = arith.constant 0 : i32
    return %c0_i32, %c0_i32_0 : i32, i32
  }
  func.func @transform_2(%arg0: i32) -> (i32, i32) {
    %c0_i32 = arith.constant 0 : i32
    %c0_i32_0 = arith.constant 0 : i32
    %c0_i32_1 = arith.constant 0 : i32
    return %c0_i32, %c0_i32_0 : i32, i32
  }
  func.func @transform_3(%arg0: i32) -> (i32, i32) {
    %c0_i32 = arith.constant 0 : i32
    %c0_i32_0 = arith.constant 0 : i32
    %c0_i32_1 = arith.constant 0 : i32
    return %c0_i32, %c0_i32_0 : i32, i32
  }
  func.func @transform_4(%arg0: i32) -> (i32, i32) {
    %c0_i32 = arith.constant 0 : i32
    %c0_i32_0 = arith.constant 0 : i32
    %c0_i32_1 = arith.constant 0 : i32
    return %c0_i32, %c0_i32_0 : i32, i32
  }
  func.func @transform_5(%arg0: i32) -> (i32, i32) {
    %c0_i32 = arith.constant 0 : i32
    %c0_i32_0 = arith.constant 0 : i32
    return %arg0, %c0_i32 : i32, i32
  }
}

</mosaic_0001>

<llo_original>
// kernel: playing_network_forward.1
$region0: #{playing_network_forward.1}
  #allocation0 [shape = 'u32[]', space=smem, size = 0x4, offset = 0x4, fixed_abs, tag = 'smem constant byte address 0x4 - core index']
  #allocation1 [shape = 'u32[144,128]{1,0:T(1,128)}', space=vmem, size = 0x12000, scoped, tag = 'internal scratch']
  #allocation2 [shape = 'f32[1,1]{1,0:T(1,128)S(6)}', space=smem, size = 0x200, scoped, tag = 'scoped memory for playing_network_forward.1']
  %s0 = inlined_call_operand.vmem [shape: f32[8,260], index: 0, kind: input, shape index: {}]
  %s1 = inlined_call_operand.vmem [shape: f32[260,128], index: 1, kind: input, shape index: {}]
  %s2 = inlined_call_operand.vmem [shape: f32[1,128], index: 2, kind: input, shape index: {}]
  %s3 = inlined_call_operand.vmem [shape: f32[1,128], index: 3, kind: input, shape index: {}]
  %s4 = inlined_call_operand.<no memory space> [shape: f32[1,1], index: 4, kind: input, shape index: {}]
  %s5 = inlined_call_operand.vmem [shape: f32[8,1], index: 5, kind: output, shape index: {}]
  %s6 = sld [smem:[#allocation0]]
  $region30: #{playing_network_forward.1} parent=0
    _
  %s8 = ssub.s32 1, %s6
  %s9 = scalar_select 0, %s8, %s6
  %10 = sst [smem:[#allocation2]] %s4
  // Predicated region
  $region2: #{playing_network_forward.1} parent=0 // pred_check
    _
  $region3: #{playing_network_forward.1} parent=0 // pred_check_branch
    %12 = sbr.rel (0) target = $region5
  $region4: #{playing_network_forward.1} parent=0 // pred_region
    _
  $region5: #{playing_network_forward.1} parent=0 // pred_fallthru
    _
  // Predicated region
  $region6: #{playing_network_forward.1} parent=0 // pred_check
    _
  $region7: #{playing_network_forward.1} parent=0 // pred_check_branch
    %14 = sbr.rel (0) target = $region9
  $region8: #{playing_network_forward.1} parent=0 // pred_region
    _
  $region9: #{playing_network_forward.1} parent=0 // pred_fallthru
    _
  // Predicated region
  $region10: #{playing_network_forward.1} parent=0 // pred_check
    _
  $region11: #{playing_network_forward.1} parent=0 // pred_check_branch
    %16 = sbr.rel (0) target = $region13
  $region12: #{playing_network_forward.1} parent=0 // pred_region
    _
  $region13: #{playing_network_forward.1} parent=0 // pred_fallthru
    _
  // Predicated region
  $region14: #{playing_network_forward.1} parent=0 // pred_check
    _
  $region15: #{playing_network_forward.1} parent=0 // pred_check_branch
    %18 = sbr.rel (0) target = $region17
  $region16: #{playing_network_forward.1} parent=0 // pred_region
    _
  $region17: #{playing_network_forward.1} parent=0 // pred_fallthru
    _
  // Predicated region
  $region18: #{playing_network_forward.1} parent=0 // pred_check
    _
  $region19: #{playing_network_forward.1} parent=0 // pred_check_branch
    %20 = sbr.rel (0) target = $region21
  $region20: #{playing_network_forward.1} parent=0 // pred_region
    _
  $region21: #{playing_network_forward.1} parent=0 // pred_fallthru
    _
  %v21 = vld [vmem:[%s0] sm:$0xff]
  %v22 = vld [vmem:[%s0 + $0x8] sm:$0xff]
  %v23 = vld [vmem:[%s0 + $0x10] sm:$0xff]
  %v24 = vld [vmem:[%s1] sm:$0xff]
  %v25 = vld [vmem:[%s1 + $0x8] sm:$0xff]
  %v26 = vld [vmem:[%s1 + $0x10] sm:$0xff]
  %v27 = vld [vmem:[%s1 + $0x18] sm:$0xff]
  %v28 = vld [vmem:[%s1 + $0x20] sm:$0xff]
  %v29 = vld [vmem:[%s1 + $0x28] sm:$0xff]
  %v30 = vld [vmem:[%s1 + $0x30] sm:$0xff]
  %v31 = vld [vmem:[%s1 + $0x38] sm:$0xff]
  %v32 = vld [vmem:[%s1 + $0x40] sm:$0xff]
  %v33 = vld [vmem:[%s1 + $0x48] sm:$0xff]
  %v34 = vld [vmem:[%s1 + $0x50] sm:$0xff]
  %v35 = vld [vmem:[%s1 + $0x58] sm:$0xff]
  %v36 = vld [vmem:[%s1 + $0x60] sm:$0xff]
  %v37 = vld [vmem:[%s1 + $0x68] sm:$0xff]
  %v38 = vld [vmem:[%s1 + $0x70] sm:$0xff]
  %v39 = vld [vmem:[%s1 + $0x78] sm:$0xff]
  %v40 = vld [vmem:[%s1 + $0x80] sm:$0xff]
  %v41 = vld [vmem:[%s1 + $0x88] sm:$0xff]
  %v42 = vld [vmem:[%s1 + $0x90] sm:$0xff]
  %v43 = vld [vmem:[%s1 + $0x98] sm:$0xff]
  %v44 = vld [vmem:[%s1 + $0xa0] sm:$0xff]
  %v45 = vld [vmem:[%s1 + $0xa8] sm:$0xff]
  %v46 = vld [vmem:[%s1 + $0xb0] sm:$0xff]
  %v47 = vld [vmem:[%s1 + $0xb8] sm:$0xff]
  %v48 = vld [vmem:[%s1 + $0xc0] sm:$0xff]
  %v49 = vld [vmem:[%s1 + $0xc8] sm:$0xff]
  %v50 = vld [vmem:[%s1 + $0xd0] sm:$0xff]
  %v51 = vld [vmem:[%s1 + $0xd8] sm:$0xff]
  %v52 = vld [vmem:[%s1 + $0xe0] sm:$0xff]
  %v53 = vld [vmem:[%s1 + $0xe8] sm:$0xff]
  %v54 = vld [vmem:[%s1 + $0xf0] sm:$0xff]
  %v55 = vld [vmem:[%s1 + $0xf8] sm:$0xff]
  %v56 = vld [vmem:[%s1 + $0x100] sm:$0xf]
  %v57 = vld [vmem:[%s2] sm:$0x1]
  %v59 = vlaneseq
  %v60 = vshrl.u32 %v59, 7
  %v61 = vsub.s32 0, %v60
  %v62 = vrot.slane %v57, %v61
  %vm64 = vcmask 31744
  %v66 = vsel %vm64, %v23, 0
  %vm68 = vcmask 1043456
  %v70 = vsel %vm68, %v56, 0
  %72 = vmatprep.subr.mxu0 0.0
  %73 = vmatpush1.msra.mxu0 %v24
  %74 = vmatprep.subr.mxu0 0.0
  %75 = vmatpush1.msra.mxu0 %v25
  %76 = vmatprep.subr.mxu0 0.0
  %77 = vmatpush1.msra.mxu0 %v26
  %78 = vmatprep.subr.mxu0 0.0
  %79 = vmatpush1.msra.mxu0 %v27
  %80 = vmatprep.subr.mxu0 0.0
  %81 = vmatpush1.msra.mxu0 %v28
  %82 = vmatprep.subr.mxu0 0.0
  %83 = vmatpush1.msra.mxu0 %v29
  %84 = vmatprep.subr.mxu0 0.0
  %85 = vmatpush1.msra.mxu0 %v30
  %86 = vmatprep.subr.mxu0 0.0
  %87 = vmatpush1.msra.mxu0 %v31
  %88 = vmatprep.subr.mxu0 0.0
  %89 = vmatpush1.msra.mxu0 %v32
  %90 = vmatprep.subr.mxu0 0.0
  %91 = vmatpush1.msra.mxu0 %v33
  %92 = vmatprep.subr.mxu0 0.0
  %93 = vmatpush1.msra.mxu0 %v34
  %94 = vmatprep.subr.mxu0 0.0
  %95 = vmatpush1.msra.mxu0 %v35
  %96 = vmatprep.subr.mxu0 0.0
  %97 = vmatpush1.msra.mxu0 %v36
  %98 = vmatprep.subr.mxu0 0.0
  %99 = vmatpush1.msra.mxu0 %v37
  %100 = vmatprep.subr.mxu0 0.0
  %101 = vmatpush1.msra.mxu0 %v38
  %102 = vmatprep.subr.mxu0 0.0
  %103 = vmatpush1.msra.mxu0 %v39
  %104 = vmatprep.subr.mxu0 0.0
  %105 = vmatpush1.msra.mxu0 %v40
  %106 = vmatprep.subr.mxu0 0.0
  %107 = vmatpush1.msra.mxu0 %v41
  %108 = vmatprep.subr.mxu0 0.0
  %109 = vmatpush1.msra.mxu0 %v42
  %110 = vmatprep.subr.mxu0 0.0
  %111 = vmatpush1.msra.mxu0 %v43
  %112 = vmatprep.subr.mxu0 0.0
  %113 = vmatpush1.msra.mxu0 %v44
  %114 = vmatprep.subr.mxu0 0.0
  %115 = vmatpush1.msra.mxu0 %v45
  %116 = vmatprep.subr.mxu0 0.0
  %117 = vmatpush1.msra.mxu0 %v46
  %118 = vmatprep.subr.mxu0 0.0
  %119 = vmatpush1.msra.mxu0 %v47
  %120 = vmatprep.subr.mxu0 0.0
  %121 = vmatpush1.msra.mxu0 %v48
  %122 = vmatprep.subr.mxu0 0.0
  %123 = vmatpush1.msra.mxu0 %v49
  %124 = vmatprep.subr.mxu0 0.0
  %125 = vmatpush1.msra.mxu0 %v50
  %126 = vmatprep.subr.mxu0 0.0
  %127 = vmatpush1.msra.mxu0 %v51
  %128 = vmatprep.subr.mxu0 0.0
  %129 = vmatpush1.msra.mxu0 %v52
  %130 = vmatprep.subr.mxu0 0.0
  %131 = vmatpush1.msra.mxu0 %v53
  %132 = vmatprep.subr.mxu0 0.0
  %133 = vmatpush1.msra.mxu0 %v54
  %134 = vmatprep.subr.mxu0 0.0
  %135 = vmatpush1.msra.mxu0 %v55
  %136 = vmatprep.mubr.f32.mxu0 %v22
  %137 = vmatmul.mubr.f32.gmra.mrb[0].mxu0 %v21
  %v138 = vpop.f32.mrb[0].mxu0
  %v139 = vadd.f32 %v62, %v138
  %v140 = vpop.f32.mrb[0].mxu0
  %141 = vdwg.mxu0
  %142 = vmatprep.subr.mxu0 0.0
  %143 = vmatpush1.msra.mxu0 %v70
  %144 = vmatprep.subr.mxu0 0.0
  %145 = vmatpush1.msra.mxu0 0.0
  %146 = vmatprep.subr.mxu0 0.0
  %147 = vmatpush1.msra.mxu0 0.0
  %148 = vmatprep.subr.mxu0 0.0
  %149 = vmatpush1.msra.mxu0 0.0
  %150 = vmatprep.subr.mxu0 0.0
  %151 = vmatpush1.msra.mxu0 0.0
  %152 = vmatprep.subr.mxu0 0.0
  %153 = vmatpush1.msra.mxu0 0.0
  %154 = vmatprep.subr.mxu0 0.0
  %155 = vmatpush1.msra.mxu0 0.0
  %156 = vmatprep.subr.mxu0 0.0
  %157 = vmatpush1.msra.mxu0 0.0
  %158 = vmatprep.subr.mxu0 0.0
  %159 = vmatpush1.msra.mxu0 0.0
  %160 = vmatprep.subr.mxu0 0.0
  %161 = vmatpush1.msra.mxu0 0.0
  %162 = vmatprep.subr.mxu0 0.0
  %163 = vmatpush1.msra.mxu0 0.0
  %164 = vmatprep.subr.mxu0 0.0
  %165 = vmatpush1.msra.mxu0 0.0
  %166 = vmatprep.subr.mxu0 0.0
  %167 = vmatpush1.msra.mxu0 0.0
  %168 = vmatprep.subr.mxu0 0.0
  %169 = vmatpush1.msra.mxu0 0.0
  %170 = vmatprep.subr.mxu0 0.0
  %171 = vmatpush1.msra.mxu0 0.0
  %172 = vmatprep.subr.mxu0 0.0
  %173 = vmatpush1.msra.mxu0 0.0
  %174 = vmatprep.subr.mxu0 0.0
  %175 = vmatpush1.msra.mxu0 0.0
  %176 = vmatprep.subr.mxu0 0.0
  %177 = vmatpush1.msra.mxu0 0.0
  %178 = vmatprep.subr.mxu0 0.0
  %179 = vmatpush1.msra.mxu0 0.0
  %180 = vmatprep.subr.mxu0 0.0
  %181 = vmatpush1.msra.mxu0 0.0
  %182 = vmatprep.subr.mxu0 0.0
  %183 = vmatpush1.msra.mxu0 0.0
  %184 = vmatprep.subr.mxu0 0.0
  %185 = vmatpush1.msra.mxu0 0.0
  %186 = vmatprep.subr.mxu0 0.0
  %187 = vmatpush1.msra.mxu0 0.0
  %188 = vmatprep.subr.mxu0 0.0
  %189 = vmatpush1.msra.mxu0 0.0
  %190 = vmatprep.subr.mxu0 0.0
  %191 = vmatpush1.msra.mxu0 0.0
  %192 = vmatprep.subr.mxu0 0.0
  %193 = vmatpush1.msra.mxu0 0.0
  %194 = vmatprep.subr.mxu0 0.0
  %195 = vmatpush1.msra.mxu0 0.0
  %196 = vmatprep.subr.mxu0 0.0
  %197 = vmatpush1.msra.mxu0 0.0
  %198 = vmatprep.subr.mxu0 0.0
  %199 = vmatpush1.msra.mxu0 0.0
  %200 = vmatprep.subr.mxu0 0.0
  %201 = vmatpush1.msra.mxu0 0.0
  %202 = vmatprep.subr.mxu0 0.0
  %203 = vmatpush1.msra.mxu0 0.0
  %204 = vmatprep.subr.mxu0 0.0
  %205 = vmatpush1.msra.mxu0 0.0
  %206 = vmatprep.mubr.f32.mxu0 0.0
  %207 = vmatmul.mubr.f32.gmra.mrb[0].mxu0 %v66
  %v208 = vpop.f32.mrb[0].mxu0
  %v209 = vadd.f32 %v139, %v208
  %v210 = vpop.f32.mrb[0].mxu0
  %211 = vdwg.mxu0
  %v212 = vxor.u32 %v209, 2147483648
  %v213 = vmul.f32 %v212, 1.442695
  %v214 = vpow.pop %v213
  %v215 = vadd.f32 %v214, 1.0
  %v216 = vrcp.pop %v215
  %v217 = vmul.f32 1.0, %v216
  %v218 = vld [vmem:[%s3] sm:$0x1]
  %v220 = vlaneseq
  %v221 = vshrl.u32 %v220, 7
  %v222 = vsub.s32 0, %v221
  %v223 = vrot.slane %v218, %v222
  %v225 = vmul.f32 %v217, %v223
  %226 = vadd.xlane.f32.xlu0 %v225
  %v227 = vpop.xlane.xlu0 %226
  %s228 = sld [smem:[#allocation2]]
  %v229 = vstv %s228
  %v230 = vadd.f32 %v227, %v229
  %v231 = vxor.u32 %v230, 2147483648
  %v232 = vmul.f32 %v231, 1.442695
  %v233 = vpow.pop %v232
  %v234 = vadd.f32 %v233, 1.0
  %v235 = vrcp.pop %v234
  %v236 = vmul.f32 1.0, %v235
  %vm237 = vcmask 7168
  %238 = vst.msk [vmem:[%s5] sm:$0xff] %vm237, %v236
  // Predicated region
  $region22: #{playing_network_forward.1} parent=0 // pred_check
    _
  $region23: #{playing_network_forward.1} parent=0 // pred_check_branch
    %240 = sbr.rel (0) target = $region25
  $region24: #{playing_network_forward.1} parent=0 // pred_region
    _
  $region25: #{playing_network_forward.1} parent=0 // pred_fallthru
    _
  // Predicated region
  $region26: #{playing_network_forward.1} parent=0 // pred_check
    _
  $region27: #{playing_network_forward.1} parent=0 // pred_check_branch
    %242 = sbr.rel (0) target = $region29
  $region28: #{playing_network_forward.1} parent=0 // pred_region
    _
  $region29: #{playing_network_forward.1} parent=0 // pred_fallthru
    _

</llo_original>
